<compile_context>
chip_gen: v7x
topology: tpu7x:2x2x1
jax: 0.10.0
libtpu: 0.0.40
codegen_flags: <defaults>
</compile_context>

<pallas_src>
import functools

import jax
import jax.numpy as jnp
from jax.experimental import pallas as pl
from jax.experimental.pallas import tpu as pltpu

EPS = 1e-5  # torch.nn.functional.batch_norm default


# ----------------------------- chip-aware budgets ---------------------------


def _vmem_capacity_bytes():
    try:
        return int(pltpu.get_tpu_info().vmem_capacity_bytes)
    except Exception:
        return 64 << 20  # conservative fallback (v7x physical VMEM)


_VMEM_CAP = _vmem_capacity_bytes()
# Fused path holds: input + output block (double buffered) + f32 temporaries.
_FUSED_VMEM_LIMIT = min(_VMEM_CAP * 3 // 4, 96 << 20)   # 96 MiB v5e/v6e, 48 MiB v7x
_FUSED_F32_BUDGET = _FUSED_VMEM_LIMIT // 8               # ~12 MiB / ~6 MiB f32 input
_TILED_VMEM_LIMIT = min(_VMEM_CAP // 2, 32 << 20)
_TILE_TARGET_BYTES = 2 << 20                             # ~2 MiB blocks (sweet spot)


# ----------------------------- kernels --------------------------------------


def _fused_kernel(x_ref, gamma_ref, beta_ref, y_ref, mean_ref, var_ref):
    """Whole-tensor batchnorm: stats + normalize in one HBM pass (1R + 1W)."""
    x = x_ref[...].astype(jnp.float32)                     # (N, C, L)
    inv_n = 1.0 / float(x.shape[0] * x.shape[2])

    mean = jnp.sum(jnp.sum(x, axis=2, keepdims=True),
                   axis=0, keepdims=True) * inv_n           # (1, C, 1)
    xc = x - mean                                           # centered (stable var)
    var = jnp.sum(jnp.sum(xc * xc, axis=2, keepdims=True),
                  axis=0, keepdims=True) * inv_n            # biased
    inv_std = jax.lax.rsqrt(var + EPS)
    scale = gamma_ref[...] * inv_std                        # (1, C, 1)

    y_ref[...] = (xc * scale + beta_ref[...]).astype(y_ref.dtype)
    mean_ref[...] = mean
    var_ref[...] = var


def _make_stats_kernel(L, tl, C, ragged):
    """Per-channel shifted sum / sum-of-squares with a lane-dense accumulator.

    Accumulator blocks are (1, C, 128); per 128-lane group we only do VPU adds
    (no per-tile cross-lane XLU reduce, no narrow masked stores).  `ragged`
    means the last spatial tile extends past the true L and must be masked.
    """
    n_full = tl // 128                 # full 128-lane groups per tile
    tail = tl - n_full * 128           # ragged tail (only when tl == L)

    def kernel(shift_ref, x_ref, sum_ref, sq_ref):
        @pl.when(pl.program_id(1) == 0)
        def _init():
            sum_ref[...] = jnp.zeros_like(sum_ref)
            sq_ref[...] = jnp.zeros_like(sq_ref)

        shift = shift_ref[...]                                    # (1, C, 1) f32
        lane = jax.lax.broadcasted_iota(jnp.int32, (1, 1, 128), 2)
        base = pl.program_id(1) * tl                              # global lane offset

        p_s = jnp.zeros((1, C, 128), jnp.float32)
        p_q = jnp.zeros((1, C, 128), jnp.float32)
        for k in range(n_full):
            chunk = x_ref[:, :, k * 128:(k + 1) * 128].astype(jnp.float32) - shift
            if ragged:
                valid = (base + k * 128 + lane) < L
                chunk = jnp.where(valid, chunk, 0.0)
            p_s = p_s + jnp.sum(chunk, axis=0, keepdims=True)
            p_q = p_q + jnp.sum(chunk * chunk, axis=0, keepdims=True)

        if tail:
            # Narrow tail exists only when the tile is the full (non-128-multiple)
            # spatial extent; fold its scalar sums into lane 0 of the accumulator.
            chunk = x_ref[:, :, n_full * 128:tl].astype(jnp.float32) - shift
            ts = jnp.sum(chunk, axis=(0, 2), keepdims=True)       # (1, C, 1)
            tq = jnp.sum(chunk * chunk, axis=(0, 2), keepdims=True)
            is_lane0 = lane == 0
            p_s = p_s + jnp.where(is_lane0, ts, 0.0)
            p_q = p_q + jnp.where(is_lane0, tq, 0.0)

        sum_ref[...] += p_s
        sq_ref[...] += p_q

    return kernel


def _norm_kernel(gamma_ref, beta_ref, mean_ref, var_ref, x_ref, y_ref):
    """y = (x - mean) * gamma / sqrt(var + eps) + beta, epilogue folded in."""
    inv_std = jax.lax.rsqrt(var_ref[...] + EPS)               # (1, C, 1)
    scale = gamma_ref[...] * inv_std
    shift = beta_ref[...] - mean_ref[...] * scale
    x = x_ref[...].astype(jnp.float32)
    y_ref[...] = (x * scale + shift).astype(y_ref.dtype)


# ----------------------------- pallas_call wrappers -------------------------


def _fused_forward(x3, gamma3, beta3):
    N, C, L = x3.shape
    chan = pl.BlockSpec((1, C, 1), lambda i: (0, 0, 0))
    full = pl.BlockSpec((N, C, L), lambda i: (0, 0, 0))
    return pl.pallas_call(
        _fused_kernel,
        out_shape=(
            jax.ShapeDtypeStruct((N, C, L), x3.dtype),
            jax.ShapeDtypeStruct((1, C, 1), jnp.float32),
            jax.ShapeDtypeStruct((1, C, 1), jnp.float32),
        ),
        grid_spec=pltpu.PrefetchScalarGridSpec(
            num_scalar_prefetch=0,
            grid=(1,),
            in_specs=[full, chan, chan],
            out_specs=[full, chan, chan],
        ),
        compiler_params=pltpu.CompilerParams(
            dimension_semantics=("arbitrary",),
            vmem_limit_bytes=_FUSED_VMEM_LIMIT,
        ),
    )(x3, gamma3, beta3)


def _channel_stats(x3, shift3, tn, tl):
    """Lane-dense per-channel shifted sum / sum-of-squares over (N, L) tiles."""
    N, C, L = x3.shape
    gn = N // tn                       # tn divides N (chosen that way)
    gl = pl.cdiv(L, tl)
    kernel = _make_stats_kernel(L=L, tl=tl, C=C, ragged=(L % tl != 0))
    acc_spec = pl.BlockSpec((1, C, 128), lambda n, l: (n, 0, 0))
    return pl.pallas_call(
        kernel,
        out_shape=(
            jax.ShapeDtypeStruct((gn, C, 128), jnp.float32),
            jax.ShapeDtypeStruct((gn, C, 128), jnp.float32),
        ),
        grid_spec=pltpu.PrefetchScalarGridSpec(
            num_scalar_prefetch=0,
            grid=(gn, gl),
            in_specs=[
                pl.BlockSpec((1, C, 1), lambda n, l: (0, 0, 0)),
                pl.BlockSpec((tn, C, tl), lambda n, l: (n, 0, l)),
            ],
            out_specs=[acc_spec, acc_spec],
        ),
        compiler_params=pltpu.CompilerParams(
            dimension_semantics=("parallel", "arbitrary"),
            vmem_limit_bytes=_TILED_VMEM_LIMIT,
        ),
    )(shift3, x3)


def _normalize(x3, gamma3, beta3, mean3, var3, tn, tl):
    N, C, L = x3.shape
    gn = N // tn
    gl = pl.cdiv(L, tl)
    chan = pl.BlockSpec((1, C, 1), lambda n, l: (0, 0, 0))
    xspec = pl.BlockSpec((tn, C, tl), lambda n, l: (n, 0, l))
    return pl.pallas_call(
        _norm_kernel,
        out_shape=jax.ShapeDtypeStruct((N, C, L), x3.dtype),
        grid_spec=pltpu.PrefetchScalarGridSpec(
            num_scalar_prefetch=0,
            grid=(gn, gl),
            in_specs=[chan, chan, chan, chan, xspec],
            out_specs=xspec,
        ),
        compiler_params=pltpu.CompilerParams(
            dimension_semantics=("parallel", "parallel"),
            vmem_limit_bytes=_TILED_VMEM_LIMIT,
        ),
    )(gamma3, beta3, mean3, var3, x3)


# ----------------------------- tiling helpers -------------------------------


def _largest_divisor_at_most(n, cap):
    cap = max(1, min(cap, n))
    for d in range(cap, 0, -1):
        if n % d == 0:
            return d
    return 1


def _pick_tiles(N, C, L, itemsize, target_bytes=_TILE_TARGET_BYTES):
    """Pick (tn, tl): batch tile (divides N) and lane-dense spatial tile."""
    bpe = max(int(itemsize), 4)              # kernels upcast to f32
    l128 = pl.cdiv(L, 128) * 128
    tl = (target_bytes // (C * bpe)) // 128 * 128
    tl = max(128, min(tl, 2048, l128))
    if tl >= L:
        tl = L                               # single spatial block (full dim)
    max_tn = max(1, target_bytes // (C * tl * bpe))
    tn = _largest_divisor_at_most(N, max_tn)
    return tn, tl


# ----------------------------- forward --------------------------------------


@functools.partial(
    jax.jit, static_argnames=("momentum", "training", "force_tiled")
)
def batch_norm_layer_forward(
    x_nchw, gamma, beta, running_mean, running_var,
    momentum=0.1, training=True, force_tiled=False,
):
    """Forward of BatchNormLayer (track_running_stats=True, affine=True).

    Returns (y_nchw, new_running_mean, new_running_var).  Running stats are
    only updated when training=True (F.batch_norm semantics).
    """
    N, C, H, W = x_nchw.shape
    L = H * W
    M = N * L
    x3 = x_nchw.reshape(N, C, L)                 # free reshape, no transpose

    gamma3 = gamma.reshape(1, C, 1).astype(jnp.float32)
    beta3 = beta.reshape(1, C, 1).astype(jnp.float32)

    if training:
        f32_bytes = N * C * L * 4
        use_fused = (not force_tiled) and (f32_bytes <= _FUSED_F32_BUDGET)

        if use_fused:
            # One HBM read + one HBM write, exact two-pass variance in VMEM.
            y3, mean3, var3 = _fused_forward(x3, gamma3, beta3)
            mean_c = mean3.reshape(C)
            var_c = var3.reshape(C)
        else:
            tn, tl = _pick_tiles(N, C, L, x3.dtype.itemsize)
            rm32 = running_mean.astype(jnp.float32).reshape(C)
            shift3 = rm32.reshape(1, C, 1)        # shifted sums (stability)
            s_acc, q_acc = _channel_stats(x3, shift3, tn, tl)
            s = jnp.sum(s_acc, axis=(0, 2))       # (C,)  sum(x - shift)
            q = jnp.sum(q_acc, axis=(0, 2))       # (C,)  sum((x - shift)^2)
            d = s / M
            mean_c = rm32 + d
            var_c = jnp.maximum(q / M - d * d, 0.0)      # biased, clamped
            mean3 = mean_c.reshape(1, C, 1)
            var3 = var_c.reshape(1, C, 1)
            y3 = _normalize(x3, gamma3, beta3, mean3, var3, tn, tl)

        # Running-stat update (unbiased variance).  Note: PyTorch raises for
        # M == 1 in training; here we just skip the correction.
        corr = (M / (M - 1)) if M > 1 else 1.0
        new_rm = ((1.0 - momentum) * running_mean
                  + momentum * mean_c).astype(running_mean.dtype)
        new_rv = ((1.0 - momentum) * running_var
                  + momentum * (var_c * corr)).astype(running_var.dtype)
    else:
        # Eval: normalize with running stats; no stats pass, no update.
        mean3 = running_mean.reshape(1, C, 1).astype(jnp.float32)
        var3 = running_var.reshape(1, C, 1).astype(jnp.float32)
        tn, tl = _pick_tiles(N, C, L, x3.dtype.itemsize)
        y3 = _normalize(x3, gamma3, beta3, mean3, var3, tn, tl)
        new_rm, new_rv = running_mean, running_var

    y = y3.reshape(N, C, H, W)
    return y, new_rm, new_rv


# ----------------------------- reference ------------------------------------


def _reference_forward(x, gamma, beta, rm, rv, momentum=0.1, training=True):
    """Pure-JAX reference matching F.batch_norm semantics."""
    if training:
        axes = (0, 2, 3)
        mean = jnp.mean(x, axis=axes)
        var = jnp.var(x, axis=axes)          # biased
        n = x.shape[0] * x.shape[2] * x.shape[3]
        new_rm = (1 - momentum) * rm + momentum * mean
        new_rv = (1 - momentum) * rv + momentum * var * (n / (n - 1))
    else:
        mean, var = rm, rv
        new_rm, new_rv = rm, rv
    mean_b = mean.reshape(1, -1, 1, 1)
    var_b = var.reshape(1, -1, 1, 1)
    y = (x - mean_b) / jnp.sqrt(var_b + EPS)
    y = y * gamma.reshape(1, -1, 1, 1) + beta.reshape(1, -1, 1, 1)
    return y, new_rm, new_rv


# ----------------------------- main ------------------------------------------


if __name__ == "__main__":
    key = jax.random.PRNGKey(0)
    k1, k2, k3 = jax.random.split(key, 3)

    def check(x, gamma, beta, rm, rv, training, force_tiled, name):
        y, nrm, nrv = batch_norm_layer_forward(
            x, gamma, beta, rm, rv,
            momentum=0.1, training=training, force_tiled=force_tiled)
        jax.block_until_ready((y, nrm, nrv))
        y_r, rm_r, rv_r = _reference_forward(
            x, gamma, beta, rm, rv, momentum=0.1, training=training)
        assert jnp.allclose(y, y_r, atol=1e-4, rtol=1e-4), name
        assert jnp.allclose(nrm, rm_r, atol=1e-5, rtol=1e-5), name
        assert jnp.allclose(nrv, rv_r, atol=1e-5, rtol=1e-5), name

    # Deterministic BatchNormLayer parameter init (affine, track_running_stats):
    C = 4
    gamma = jnp.ones((C,), jnp.float32)           # nn.init.ones_(self.scale)
    beta = jnp.zeros((C,), jnp.float32)           # nn.init.zeros_(self.bias)
    running_mean = jnp.zeros((C,), jnp.float32)   # mean_0 buffer
    running_var = jnp.ones((C,), jnp.float32)     # var_0  buffer

    # 1) Main spec shape through the fused single-pass path (training).
    x = jax.random.normal(k1, (2, C, 16, 16), jnp.float32) * 2.0 + 0.5
    check(x, gamma, beta, running_mean, running_var, True, False, "fused")

    # 2) Same tensor through the two-pass tiled path.
    check(x, gamma, beta, running_mean, running_var, True, True, "tiled")

    # 3) Ragged spatial extent (L=2500, not a tile multiple) -> mask + OOB-drop
    #    paths of the tiled kernels.
    x_ragged = jax.random.normal(k2, (2, C, 50, 50), jnp.float32) * 1.5 - 0.3
    check(x_ragged, gamma, beta, running_mean, running_var, True, True,
          "tiled-ragged")

    # 4) Ragged spatial extent through the fused path (L=144, full-dim block).
    x_small = jax.random.normal(k3, (3, C, 12, 12), jnp.float32) + 1.0
    check(x_small, gamma, beta, running_mean, running_var, True, False,
          "fused-ragged")

    # 5) Eval mode with non-trivial running stats (normalize-only kernel).
    rm_e = jnp.linspace(-0.5, 0.5, C).astype(jnp.float32)
    rv_e = jnp.linspace(0.5, 2.0, C).astype(jnp.float32)
    check(x, gamma, beta, rm_e, rv_e, False, False, "eval")

    print("KERNEL_OK")
</pallas_src>

<mosaic_0001>
module attributes {stable_mosaic.version = 11 : i64} {
  func.func @_fused_kernel(%arg0: i32, %arg1: memref<2x4x256xf32, #tpu.memory_space<vmem>>, %arg2: memref<1x4x1xf32, #tpu.memory_space<vmem>>, %arg3: memref<1x4x1xf32, #tpu.memory_space<vmem>>, %arg4: memref<2x4x256xf32, #tpu.memory_space<vmem>>, %arg5: memref<1x4x1xf32, #tpu.memory_space<vmem>>, %arg6: memref<1x4x1xf32, #tpu.memory_space<vmem>>) attributes {dimension_semantics = [#tpu.dimension_semantics<arbitrary>], iteration_bounds = array<i64: 1>, scalar_prefetch = 0 : i64, scratch_operands = 0 : i64, tpu.core_type = #tpu.core_type<tc>, window_params = [{pipeline_mode = #tpu.pipeline_mode<synchronous>, transform_indices = @transform_0, window_bounds = array<i64: 2, 4, 256>}, {pipeline_mode = #tpu.pipeline_mode<synchronous>, transform_indices = @transform_1, window_bounds = array<i64: 1, 4, 1>}, {pipeline_mode = #tpu.pipeline_mode<synchronous>, transform_indices = @transform_2, window_bounds = array<i64: 1, 4, 1>}, {pipeline_mode = #tpu.pipeline_mode<synchronous>, transform_indices = @transform_3, window_bounds = array<i64: 2, 4, 256>}, {pipeline_mode = #tpu.pipeline_mode<synchronous>, transform_indices = @transform_4, window_bounds = array<i64: 1, 4, 1>}, {pipeline_mode = #tpu.pipeline_mode<synchronous>, transform_indices = @transform_5, window_bounds = array<i64: 1, 4, 1>}]} {
    %c0 = arith.constant 0 : index
    %c0_0 = arith.constant 0 : index
    %c0_1 = arith.constant 0 : index
    %0 = vector.load %arg1[%c0, %c0_0, %c0_1] : memref<2x4x256xf32, #tpu.memory_space<vmem>>, vector<2x4x256xf32>
    %cst = arith.constant dense<0.000000e+00> : vector<2x4xf32>
    %1 = vector.multi_reduction <add>, %0, %cst [2] : vector<2x4x256xf32> to vector<2x4xf32>
    %2 = vector.shape_cast %1 : vector<2x4xf32> to vector<2x4x1xf32>
    %cst_2 = arith.constant dense<0.000000e+00> : vector<4x1xf32>
    %3 = vector.multi_reduction <add>, %2, %cst_2 [0] : vector<2x4x1xf32> to vector<4x1xf32>
    %4 = vector.shape_cast %3 : vector<4x1xf32> to vector<1x4x1xf32>
    %cst_3 = arith.constant 0.001953125 : f32
    %5 = vector.broadcast %cst_3 : f32 to vector<1x4x1xf32>
    %6 = arith.mulf %4, %5 : vector<1x4x1xf32>
    %7 = vector.broadcast %6 : vector<1x4x1xf32> to vector<2x4x256xf32>
    %8 = arith.subf %0, %7 : vector<2x4x256xf32>
    %9 = arith.mulf %8, %8 : vector<2x4x256xf32>
    %cst_4 = arith.constant dense<0.000000e+00> : vector<2x4xf32>
    %10 = vector.multi_reduction <add>, %9, %cst_4 [2] : vector<2x4x256xf32> to vector<2x4xf32>
    %11 = vector.shape_cast %10 : vector<2x4xf32> to vector<2x4x1xf32>
    %cst_5 = arith.constant dense<0.000000e+00> : vector<4x1xf32>
    %12 = vector.multi_reduction <add>, %11, %cst_5 [0] : vector<2x4x1xf32> to vector<4x1xf32>
    %13 = vector.shape_cast %12 : vector<4x1xf32> to vector<1x4x1xf32>
    %cst_6 = arith.constant 0.001953125 : f32
    %14 = vector.broadcast %cst_6 : f32 to vector<1x4x1xf32>
    %15 = arith.mulf %13, %14 : vector<1x4x1xf32>
    %cst_7 = arith.constant 9.99999974E-6 : f32
    %16 = vector.broadcast %cst_7 : f32 to vector<1x4x1xf32>
    %17 = arith.addf %15, %16 : vector<1x4x1xf32>
    %18 = math.rsqrt %17 : vector<1x4x1xf32>
    %c0_8 = arith.constant 0 : index
    %c0_9 = arith.constant 0 : index
    %c0_10 = arith.constant 0 : index
    %19 = vector.load %arg2[%c0_8, %c0_9, %c0_10] : memref<1x4x1xf32, #tpu.memory_space<vmem>>, vector<1x4x1xf32>
    %20 = arith.mulf %19, %18 : vector<1x4x1xf32>
    %21 = vector.broadcast %20 : vector<1x4x1xf32> to vector<2x4x256xf32>
    %22 = arith.mulf %8, %21 : vector<2x4x256xf32>
    %c0_11 = arith.constant 0 : index
    %c0_12 = arith.constant 0 : index
    %c0_13 = arith.constant 0 : index
    %23 = vector.load %arg3[%c0_11, %c0_12, %c0_13] : memref<1x4x1xf32, #tpu.memory_space<vmem>>, vector<1x4x1xf32>
    %24 = vector.broadcast %23 : vector<1x4x1xf32> to vector<2x4x256xf32>
    %25 = arith.addf %22, %24 : vector<2x4x256xf32>
    %c0_14 = arith.constant 0 : index
    %c0_15 = arith.constant 0 : index
    %c0_16 = arith.constant 0 : index
    %26 = vector.load %arg4[%c0_14, %c0_15, %c0_16] : memref<2x4x256xf32, #tpu.memory_space<vmem>>, vector<2x4x256xf32>
    tpu.vector_store %arg4[%c0_14, %c0_15, %c0_16], %25 {strides = array<i32>} : memref<2x4x256xf32, #tpu.memory_space<vmem>>, vector<2x4x256xf32>,
    %c0_17 = arith.constant 0 : index
    %c0_18 = arith.constant 0 : index
    %c0_19 = arith.constant 0 : index
    %27 = vector.load %arg5[%c0_17, %c0_18, %c0_19] : memref<1x4x1xf32, #tpu.memory_space<vmem>>, vector<1x4x1xf32>
    tpu.vector_store %arg5[%c0_17, %c0_18, %c0_19], %6 {strides = array<i32>} : memref<1x4x1xf32, #tpu.memory_space<vmem>>, vector<1x4x1xf32>,
    %c0_20 = arith.constant 0 : index
    %c0_21 = arith.constant 0 : index
    %c0_22 = arith.constant 0 : index
    %28 = vector.load %arg6[%c0_20, %c0_21, %c0_22] : memref<1x4x1xf32, #tpu.memory_space<vmem>>, vector<1x4x1xf32>
    tpu.vector_store %arg6[%c0_20, %c0_21, %c0_22], %15 {strides = array<i32>} : memref<1x4x1xf32, #tpu.memory_space<vmem>>, vector<1x4x1xf32>,
    return
  }
  func.func @transform_0(%arg0: i32) -> (i32, i32, i32) {
    %c0_i32 = arith.constant 0 : i32
    %c0_i32_0 = arith.constant 0 : i32
    %c0_i32_1 = arith.constant 0 : i32
    %c0_i32_2 = arith.constant 0 : i32
    return %c0_i32, %c0_i32_0, %c0_i32_1 : i32, i32, i32
  }
  func.func @transform_1(%arg0: i32) -> (i32, i32, i32) {
    %c0_i32 = arith.constant 0 : i32
    %c0_i32_0 = arith.constant 0 : i32
    %c0_i32_1 = arith.constant 0 : i32
    %c0_i32_2 = arith.constant 0 : i32
    return %c0_i32, %c0_i32_0, %c0_i32_1 : i32, i32, i32
  }
  func.func @transform_2(%arg0: i32) -> (i32, i32, i32) {
    %c0_i32 = arith.constant 0 : i32
    %c0_i32_0 = arith.constant 0 : i32
    %c0_i32_1 = arith.constant 0 : i32
    %c0_i32_2 = arith.constant 0 : i32
    return %c0_i32, %c0_i32_0, %c0_i32_1 : i32, i32, i32
  }
  func.func @transform_3(%arg0: i32) -> (i32, i32, i32) {
    %c0_i32 = arith.constant 0 : i32
    %c0_i32_0 = arith.constant 0 : i32
    %c0_i32_1 = arith.constant 0 : i32
    %c0_i32_2 = arith.constant 0 : i32
    return %c0_i32, %c0_i32_0, %c0_i32_1 : i32, i32, i32
  }
  func.func @transform_4(%arg0: i32) -> (i32, i32, i32) {
    %c0_i32 = arith.constant 0 : i32
    %c0_i32_0 = arith.constant 0 : i32
    %c0_i32_1 = arith.constant 0 : i32
    %c0_i32_2 = arith.constant 0 : i32
    return %c0_i32, %c0_i32_0, %c0_i32_1 : i32, i32, i32
  }
  func.func @transform_5(%arg0: i32) -> (i32, i32, i32) {
    %c0_i32 = arith.constant 0 : i32
    %c0_i32_0 = arith.constant 0 : i32
    %c0_i32_1 = arith.constant 0 : i32
    %c0_i32_2 = arith.constant 0 : i32
    return %c0_i32, %c0_i32_0, %c0_i32_1 : i32, i32, i32
  }
}

</mosaic_0001>

<llo_original>
// kernel: batch_norm_layer_forward.1
$region0: #{batch_norm_layer_forward.1}
  #allocation0 [shape = 'u32[]', space=smem, size = 0x4, offset = 0x4, fixed_abs, tag = 'smem constant byte address 0x4 - core index']
  #allocation1 [shape = 'u32[144,128]{1,0:T(1,128)}', space=vmem, size = 0x12000, scoped, tag = 'internal scratch']
  %s0 = inlined_call_operand.vmem [shape: f32[2,4,256], index: 0, kind: input, shape index: {}]
  %s1 = inlined_call_operand.vmem [shape: f32[1,4,1], index: 1, kind: input, shape index: {}]
  %s2 = inlined_call_operand.vmem [shape: f32[1,4,1], index: 2, kind: input, shape index: {}]
  %s3 = inlined_call_operand.vmem [shape: f32[2,4,256], index: 3, kind: output, shape index: {0}]
  %s4 = inlined_call_operand.vmem [shape: f32[1,4,1], index: 4, kind: output, shape index: {1}]
  %s5 = inlined_call_operand.vmem [shape: f32[1,4,1], index: 5, kind: output, shape index: {2}]
  %6 = xla_tuple %s3, %s4, %s5
  %s7 = sld [smem:[#allocation0]]
  $region38: #{batch_norm_layer_forward.1} parent=0
    _
  %s9 = ssub.s32 1, %s7
  %s10 = scalar_select 0, %s9, %s7
  // Predicated region
  $region2: #{batch_norm_layer_forward.1} parent=0 // pred_check
    _
  $region3: #{batch_norm_layer_forward.1} parent=0 // pred_check_branch
    %12 = sbr.rel (0) target = $region5
  $region4: #{batch_norm_layer_forward.1} parent=0 // pred_region
    _
  $region5: #{batch_norm_layer_forward.1} parent=0 // pred_fallthru
    _
  // Predicated region
  $region6: #{batch_norm_layer_forward.1} parent=0 // pred_check
    _
  $region7: #{batch_norm_layer_forward.1} parent=0 // pred_check_branch
    %14 = sbr.rel (0) target = $region9
  $region8: #{batch_norm_layer_forward.1} parent=0 // pred_region
    _
  $region9: #{batch_norm_layer_forward.1} parent=0 // pred_fallthru
    _
  // Predicated region
  $region10: #{batch_norm_layer_forward.1} parent=0 // pred_check
    _
  $region11: #{batch_norm_layer_forward.1} parent=0 // pred_check_branch
    %16 = sbr.rel (0) target = $region13
  $region12: #{batch_norm_layer_forward.1} parent=0 // pred_region
    _
  $region13: #{batch_norm_layer_forward.1} parent=0 // pred_fallthru
    _
  %v17 = vld [vmem:[%s0] sm:$0xff]
  %v18 = vld [vmem:[%s0 + $0x8] sm:$0xff]
  %v21 = vcombine.high %v17, %v17
  %v22 = vcombine.high %v18, %v18
  %vm25 = vcmask 1043456
  %v26 = vsel %vm25, %v17, 0.0
  %v27 = vsel %vm25, %v21, 0.0
  %v28 = vadd.f32 %v26, %v27
  %29 = vadd.xlane.f32.xlu0 %v28
  %v30 = vpop.xlane.xlu0 %29
  %v31 = vsel %vm25, %v18, 0.0
  %v32 = vsel %vm25, %v22, 0.0
  %v33 = vadd.f32 %v31, %v32
  %34 = vadd.xlane.f32.xlu0 %v33
  %v35 = vpop.xlane.xlu0 %34
  %v36 = vsel %vm25, %v30, 0.0
  %v37 = vsel %vm25, %v35, 0.0
  %v38 = vadd.f32 %v36, %v37
  %v39 = vmul.f32 %v38, 0.001953125
  %v42 = vunpack.c.l.s4 839922192
  %v43 = vunpack.c.0.s8 %v42
  %v44 = vlaneseq
  %v45 = vshrl.u32 %v44, 7
  %v46 = vsub.s32 %v43, %v45
  %v47 = vrot.slane %v39, %v46
  %v49 = vsub.f32 %v17, %v47
  %v50 = vsub.f32 %v18, %v47
  %v51 = vmul.f32 %v49, %v49
  %v52 = vmul.f32 %v50, %v50
  %v55 = vcombine.high %v51, %v51
  %v56 = vcombine.high %v52, %v52
  %v59 = vsel %vm25, %v51, 0.0
  %v60 = vsel %vm25, %v55, 0.0
  %v61 = vadd.f32 %v59, %v60
  %62 = vadd.xlane.f32.xlu0 %v61
  %v63 = vpop.xlane.xlu0 %62
  %v64 = vsel %vm25, %v52, 0.0
  %v65 = vsel %vm25, %v56, 0.0
  %v66 = vadd.f32 %v64, %v65
  %67 = vadd.xlane.f32.xlu0 %v66
  %v68 = vpop.xlane.xlu0 %67
  %v69 = vsel %vm25, %v63, 0.0
  %v70 = vsel %vm25, %v68, 0.0
  %v71 = vadd.f32 %v69, %v70
  %v72 = vmul.f32 %v71, 0.001953125
  %v73 = vadd.f32 %v72, 1e-05
  %v74 = vrsqrt.pop %v73
  %v75 = vld [vmem:[%s1] sm:$0xf]
  %v76 = vmul.f32 %v75, %v74
  %78 = vset.pattern.permute.xlu0 0
  %79 = vperm.xlu0 %78, %v76
  %v80 = vpop.permute.xlu0 %79
  %v82 = vunpack.c.l.s4 839922192
  %v83 = vunpack.c.0.s8 %v82
  %v84 = vlaneseq
  %v85 = vshrl.u32 %v84, 7
  %v86 = vsub.s32 %v83, %v85
  %v87 = vrot.slane %v80, %v86
  %v89 = vmul.f32 %v49, %v87
  %v90 = vmul.f32 %v50, %v87
  %v91 = vld [vmem:[%s2] sm:$0xf]
  %93 = vset.pattern.permute.xlu0 0
  %94 = vperm.xlu0 %93, %v91
  %v95 = vpop.permute.xlu0 %94
  %v97 = vunpack.c.l.s4 839922192
  %v98 = vunpack.c.0.s8 %v97
  %v99 = vlaneseq
  %v100 = vshrl.u32 %v99, 7
  %v101 = vsub.s32 %v98, %v100
  %v102 = vrot.slane %v95, %v101
  %v104 = vadd.f32 %v89, %v102
  %v105 = vadd.f32 %v90, %v102
  %106 = vst [vmem:[%s3] sm:$0xff] %v104
  %107 = vst [vmem:[%s3 + $0x8] sm:$0xff] %v105
  %vm108 = vcmask 3072
  %109 = vst.msk [vmem:[%s4] sm:$0xf] %vm108, %v39
  %110 = vst.msk [vmem:[%s5] sm:$0xf] %vm108, %v72
  // Predicated region
  $region14: #{batch_norm_layer_forward.1} parent=0 // pred_check
    _
  $region15: #{batch_norm_layer_forward.1} parent=0 // pred_check_branch
    %112 = sbr.rel (0) target = $region17
  $region16: #{batch_norm_layer_forward.1} parent=0 // pred_region
    _
  $region17: #{batch_norm_layer_forward.1} parent=0 // pred_fallthru
    _
  // Predicated region
  $region18: #{batch_norm_layer_forward.1} parent=0 // pred_check
    _
  $region19: #{batch_norm_layer_forward.1} parent=0 // pred_check_branch
    %114 = sbr.rel (0) target = $region21
  $region20: #{batch_norm_layer_forward.1} parent=0 // pred_region
    _
  $region21: #{batch_norm_layer_forward.1} parent=0 // pred_fallthru
    _
  // Predicated region
  $region22: #{batch_norm_layer_forward.1} parent=0 // pred_check
    _
  $region23: #{batch_norm_layer_forward.1} parent=0 // pred_check_branch
    %116 = sbr.rel (0) target = $region25
  $region24: #{batch_norm_layer_forward.1} parent=0 // pred_region
    _
  $region25: #{batch_norm_layer_forward.1} parent=0 // pred_fallthru
    _
  // Predicated region
  $region26: #{batch_norm_layer_forward.1} parent=0 // pred_check
    _
  $region27: #{batch_norm_layer_forward.1} parent=0 // pred_check_branch
    %118 = sbr.rel (0) target = $region29
  $region28: #{batch_norm_layer_forward.1} parent=0 // pred_region
    _
  $region29: #{batch_norm_layer_forward.1} parent=0 // pred_fallthru
    _
  // Predicated region
  $region30: #{batch_norm_layer_forward.1} parent=0 // pred_check
    _
  $region31: #{batch_norm_layer_forward.1} parent=0 // pred_check_branch
    %120 = sbr.rel (0) target = $region33
  $region32: #{batch_norm_layer_forward.1} parent=0 // pred_region
    _
  $region33: #{batch_norm_layer_forward.1} parent=0 // pred_fallthru
    _
  // Predicated region
  $region34: #{batch_norm_layer_forward.1} parent=0 // pred_check
    _
  $region35: #{batch_norm_layer_forward.1} parent=0 // pred_check_branch
    %122 = sbr.rel (0) target = $region37
  $region36: #{batch_norm_layer_forward.1} parent=0 // pred_region
    _
  $region37: #{batch_norm_layer_forward.1} parent=0 // pred_fallthru
    _

</llo_original>
